<compile_context>
chip_gen: v7x
topology: tpu7x:2x2x1
jax: 0.10.0
libtpu: 0.0.40
codegen_flags: <defaults>
</compile_context>

<pallas_src>
import functools

import jax
import jax.numpy as jnp
from jax import lax
from jax.experimental import pallas as pl
from jax.experimental.pallas import tpu as pltpu

_LANES = 128
_EPS = 1e-5


def _cnn_block_kernel(patches_ref, w_ref, gamma_ref, beta_ref, out_ref):
    # patches_ref: (Bn, HW, CKK) bf16      w_ref: (CKK, Cp) bf16
    # gamma_ref / beta_ref: (1, Cp) f32    out_ref: (Bn, HW, Cp) f32
    bn, hw, ckk = patches_ref.shape
    cp = w_ref.shape[1]

    # Conv-as-matmul on the MXU: M = Bn*HW, K = CKK, N = Cp (lane-dense), f32 accumulation.
    p = patches_ref[...].reshape(bn * hw, ckk)
    y = jnp.dot(p, w_ref[...], preferred_element_type=jnp.float32)   # (Bn*HW, Cp) f32
    y = y.reshape(bn, hw, cp)                                         # per-image view for stats

    # InstanceNorm2d: per-(image, channel) biased stats over the spatial axis, single pass.
    inv_hw = 1.0 / hw
    s1 = jnp.sum(y, axis=1, keepdims=True)          # (Bn, 1, Cp)
    s2 = jnp.sum(y * y, axis=1, keepdims=True)      # (Bn, 1, Cp)
    mean = s1 * inv_hw
    var = jnp.maximum(s2 * inv_hw - mean * mean, 0.0)   # clamp: guard f32 cancellation
    inv_std = lax.rsqrt(var + _EPS)

    # Affine folded into one scale/shift, then LeakyReLU(0.2); one store per tile.
    scale = gamma_ref[...] * inv_std                # (Bn, 1, Cp)
    shift = beta_ref[...] - mean * scale            # (Bn, 1, Cp)
    y_aff = y * scale + shift
    out_ref[...] = jnp.where(y_aff >= 0, y_aff, 0.2 * y_aff).astype(out_ref.dtype)


def cnn_block_forward(x, weight, gamma, beta, *, stride):
    """x: (N, Cin, H, W) f32, weight: (Cout, Cin, 4, 4), gamma/beta: (Cout,) -> (N, Cout, Ho, Wo)."""
    N, Cin, H, W = x.shape
    Cout, _, K, _ = weight.shape
    pad = 1
    Ho = (H + 2 * pad - K) // stride + 1
    Wo = (W + 2 * pad - K) // stride + 1
    HW = Ho * Wo
    CKK = Cin * K * K
    Cp = ((Cout + _LANES - 1) // _LANES) * _LANES        # lane-dense padded channel count

    # Images per grid step: target >= 256 matmul rows, capped by a per-step VMEM budget so the
    # double-buffered in/out blocks fit v7x's 64 MiB VMEM as well as v6e/v5e's 128 MiB.
    def _block_bytes(b):
        return b * HW * (CKK * 2 + Cp * 4)               # bf16 patches block + f32 out block

    bn = max(1, -(-256 // HW))
    while bn > 1 and _block_bytes(bn) > 8 * 1024 * 1024:
        bn -= 1
    bn = min(bn, N)
    Np = ((N + bn - 1) // bn) * bn                       # pad batch to a multiple of bn

    # --- glue: reflect pad + im2col (layout plumbing; dominant HBM bytes are cast to bf16). ---
    # TODO(synk): eliminate the K*K=16x im2col read blowup by streaming the reflect-padded input
    #             and accumulating the 16 shifted matmuls into an f32 VMEM scratch in-kernel.
    # TODO(synk): for very large Ho*Wo add an HW-tile grid axis with a two-pass InstanceNorm
    #             (accumulate sum/sumsq per tile, finalize with pl.when).
    xp = jnp.pad(x, ((0, 0), (0, 0), (pad, pad), (pad, pad)), mode="reflect")
    cols = []
    for kh in range(K):
        for kw in range(K):
            cols.append(
                xp[:, :, kh:kh + (Ho - 1) * stride + 1:stride,
                         kw:kw + (Wo - 1) * stride + 1:stride])      # (N, Cin, Ho, Wo)
    patches = jnp.stack(cols, axis=2)                 # (N, Cin, K*K, Ho, Wo)
    patches = patches.transpose(0, 3, 4, 1, 2)        # (N, Ho, Wo, Cin, K*K)
    patches = patches.reshape(N, HW, CKK).astype(jnp.bfloat16)
    if Np != N:
        patches = jnp.pad(patches, ((0, Np - N), (0, 0), (0, 0)))

    w_mat = weight.reshape(Cout, CKK).T.astype(jnp.bfloat16)        # (CKK, Cout)
    w_mat = jnp.pad(w_mat, ((0, 0), (0, Cp - Cout)))                # zero-padded -> (CKK, Cp)
    gamma_p = jnp.pad(gamma.astype(jnp.float32).reshape(1, Cout),
                      ((0, 0), (0, Cp - Cout)), constant_values=1.0)
    beta_p = jnp.pad(beta.astype(jnp.float32).reshape(1, Cout),
                     ((0, 0), (0, Cp - Cout)))

    # Explicit scoped-VMEM limit: double-buffered in/out blocks + weights/affine + slack,
    # clamped to [32 MiB, 64 MiB] so it is valid on every generation (v7x physical = 64 MiB).
    vmem_need = 2 * (_block_bytes(bn) + CKK * Cp * 2 + 2 * Cp * 4) + (4 << 20)
    vmem_limit = int(min(max(vmem_need, 32 << 20), 64 << 20))

    out_flat = pl.pallas_call(
        _cnn_block_kernel,
        out_shape=jax.ShapeDtypeStruct((Np, HW, Cp), jnp.float32),
        grid_spec=pltpu.PrefetchScalarGridSpec(
            num_scalar_prefetch=0,
            grid=(Np // bn,),
            in_specs=[
                pl.BlockSpec((bn, HW, CKK), lambda i: (i, 0, 0)),
                pl.BlockSpec((CKK, Cp), lambda i: (0, 0)),
                pl.BlockSpec((1, Cp), lambda i: (0, 0)),
                pl.BlockSpec((1, Cp), lambda i: (0, 0)),
            ],
            out_specs=pl.BlockSpec((bn, HW, Cp), lambda i: (i, 0, 0)),
        ),
        compiler_params=pltpu.CompilerParams(
            dimension_semantics=("parallel",),
            vmem_limit_bytes=vmem_limit),
    )(patches, w_mat, gamma_p, beta_p)

    # Back to NCHW (required to match the PyTorch module's output layout); padded batch/channels
    # sliced off.  TODO(synk): if the consumer accepts NHWC, return
    # out_flat[:N, :, :Cout].reshape(N, Ho, Wo, Cout) and skip this transpose (saves one full
    # HBM round trip of the output).
    out = out_flat[:N, :, :Cout].reshape(N, Ho, Wo, Cout).transpose(0, 3, 1, 2)
    return out


def _reference_forward(x, weight, gamma, beta, *, stride):
    """Pure-JAX reference (PyTorch semantics) for validation."""
    xp = jnp.pad(x, ((0, 0), (0, 0), (1, 1), (1, 1)), mode="reflect")
    y = lax.conv_general_dilated(
        xp, weight, window_strides=(stride, stride), padding="VALID",
        dimension_numbers=("NCHW", "OIHW", "NCHW"),
        precision=lax.Precision.HIGHEST)
    mean = jnp.mean(y, axis=(2, 3), keepdims=True)
    var = jnp.mean((y - mean) ** 2, axis=(2, 3), keepdims=True)
    y_hat = (y - mean) * lax.rsqrt(var + 1e-5)
    y_aff = y_hat * gamma.reshape(1, -1, 1, 1) + beta.reshape(1, -1, 1, 1)
    return jnp.where(y_aff >= 0, y_aff, 0.2 * y_aff)


if __name__ == "__main__":
    key = jax.random.PRNGKey(0)
    k_x, k_w, k_g, k_b = jax.random.split(key, 4)

    N, Cin, H, W = 2, 4, 16, 16
    Cout, K, stride = 8, 4, 2

    x = jax.random.normal(k_x, (N, Cin, H, W), dtype=jnp.float32)
    weight = jax.random.normal(k_w, (Cout, Cin, K, K), dtype=jnp.float32) * 0.05
    gamma = 1.0 + 0.1 * jax.random.normal(k_g, (Cout,), dtype=jnp.float32)
    beta = 0.1 * jax.random.normal(k_b, (Cout,), dtype=jnp.float32)

    fwd = jax.jit(functools.partial(cnn_block_forward, stride=stride))
    out = jax.block_until_ready(fwd(x, weight, gamma, beta))

    Ho = (H + 2 - K) // stride + 1
    Wo = (W + 2 - K) // stride + 1
    assert out.shape == (N, Cout, Ho, Wo)

    # Tight check: reference fed the same bf16-quantized conv operands the kernel uses
    # (remaining differences are only f32 accumulation order / rsqrt rounding).
    ref_q = _reference_forward(
        x.astype(jnp.bfloat16).astype(jnp.float32),
        weight.astype(jnp.bfloat16).astype(jnp.float32),
        gamma, beta, stride=stride)
    assert jnp.allclose(out, ref_q, atol=5e-3, rtol=5e-3), "mismatch vs bf16-quantized reference"

    # Loose check vs the full-f32 reference (bf16 matmul inputs -> ~1e-2 expected error).
    ref = _reference_forward(x, weight, gamma, beta, stride=stride)
    assert jnp.allclose(out, ref, atol=5e-2, rtol=5e-2), "mismatch vs f32 reference"

    print("KERNEL_OK")
</pallas_src>

<mosaic_0001>
module attributes {stable_mosaic.version = 11 : i64} {
  func.func @_cnn_block_kernel(%arg0: i32, %arg1: memref<2x64x64xbf16, #tpu.memory_space<vmem>>, %arg2: memref<64x128xbf16, #tpu.memory_space<vmem>>, %arg3: memref<1x128xf32, #tpu.memory_space<vmem>>, %arg4: memref<1x128xf32, #tpu.memory_space<vmem>>, %arg5: memref<2x64x128xf32, #tpu.memory_space<vmem>>) attributes {dimension_semantics = [#tpu.dimension_semantics<parallel>], iteration_bounds = array<i64: 1>, scalar_prefetch = 0 : i64, scratch_operands = 0 : i64, tpu.core_type = #tpu.core_type<tc>, window_params = [{transform_indices = @transform_0, window_bounds = array<i64: 2, 64, 64>}, {pipeline_mode = #tpu.pipeline_mode<synchronous>, transform_indices = @transform_1, window_bounds = array<i64: 64, 128>}, {pipeline_mode = #tpu.pipeline_mode<synchronous>, transform_indices = @transform_2, window_bounds = array<i64: 1, 128>}, {pipeline_mode = #tpu.pipeline_mode<synchronous>, transform_indices = @transform_3, window_bounds = array<i64: 1, 128>}, {transform_indices = @transform_4, window_bounds = array<i64: 2, 64, 128>}]} {
    %c0 = arith.constant 0 : index
    %c0_0 = arith.constant 0 : index
    %c0_1 = arith.constant 0 : index
    %0 = vector.load %arg1[%c0, %c0_0, %c0_1] : memref<2x64x64xbf16, #tpu.memory_space<vmem>>, vector<2x64x64xbf16>
    %1 = vector.shape_cast %0 : vector<2x64x64xbf16> to vector<128x64xbf16>
    %c0_2 = arith.constant 0 : index
    %c0_3 = arith.constant 0 : index
    %2 = vector.load %arg2[%c0_2, %c0_3] : memref<64x128xbf16, #tpu.memory_space<vmem>>, vector<64x128xbf16>
    %cst = arith.constant dense<0.000000e+00> : vector<128x128xf32>
    %3 = tpu.matmul %1, %2, %cst {dimension_numbers = #tpu.dot_dimension_numbers<[1], [0], [0], [1], [0, 0, 1, 1], [], []>} : vector<128x64xbf16>, vector<64x128xbf16>, vector<128x128xf32> -> vector<128x128xf32>
    %4 = vector.shape_cast %3 : vector<128x128xf32> to vector<2x64x128xf32>
    %cst_4 = arith.constant dense<0.000000e+00> : vector<2x128xf32>
    %5 = vector.multi_reduction <add>, %4, %cst_4 [1] : vector<2x64x128xf32> to vector<2x128xf32>
    %6 = vector.shape_cast %5 : vector<2x128xf32> to vector<2x1x128xf32>
    %7 = arith.mulf %4, %4 : vector<2x64x128xf32>
    %cst_5 = arith.constant dense<0.000000e+00> : vector<2x128xf32>
    %8 = vector.multi_reduction <add>, %7, %cst_5 [1] : vector<2x64x128xf32> to vector<2x128xf32>
    %9 = vector.shape_cast %8 : vector<2x128xf32> to vector<2x1x128xf32>
    %cst_6 = arith.constant 1.562500e-02 : f32
    %10 = vector.broadcast %cst_6 : f32 to vector<2x1x128xf32>
    %11 = arith.mulf %6, %10 : vector<2x1x128xf32>
    %cst_7 = arith.constant 1.562500e-02 : f32
    %12 = vector.broadcast %cst_7 : f32 to vector<2x1x128xf32>
    %13 = arith.mulf %9, %12 : vector<2x1x128xf32>
    %14 = arith.mulf %11, %11 : vector<2x1x128xf32>
    %15 = arith.subf %13, %14 : vector<2x1x128xf32>
    %cst_8 = arith.constant 0.000000e+00 : f32
    %16 = vector.broadcast %cst_8 : f32 to vector<2x1x128xf32>
    %17 = arith.maximumf %15, %16 : vector<2x1x128xf32>
    %cst_9 = arith.constant 9.99999974E-6 : f32
    %18 = vector.broadcast %cst_9 : f32 to vector<2x1x128xf32>
    %19 = arith.addf %17, %18 : vector<2x1x128xf32>
    %20 = math.rsqrt %19 : vector<2x1x128xf32>
    %c0_10 = arith.constant 0 : index
    %c0_11 = arith.constant 0 : index
    %21 = vector.load %arg3[%c0_10, %c0_11] : memref<1x128xf32, #tpu.memory_space<vmem>>, vector<1x128xf32>
    %22 = vector.shape_cast %21 : vector<1x128xf32> to vector<1x1x128xf32>
    %23 = vector.broadcast %22 : vector<1x1x128xf32> to vector<2x1x128xf32>
    %24 = arith.mulf %23, %20 : vector<2x1x128xf32>
    %c0_12 = arith.constant 0 : index
    %c0_13 = arith.constant 0 : index
    %25 = vector.load %arg4[%c0_12, %c0_13] : memref<1x128xf32, #tpu.memory_space<vmem>>, vector<1x128xf32>
    %26 = arith.mulf %11, %24 : vector<2x1x128xf32>
    %27 = vector.shape_cast %25 : vector<1x128xf32> to vector<1x1x128xf32>
    %28 = vector.broadcast %27 : vector<1x1x128xf32> to vector<2x1x128xf32>
    %29 = arith.subf %28, %26 : vector<2x1x128xf32>
    %30 = vector.broadcast %24 : vector<2x1x128xf32> to vector<2x64x128xf32>
    %31 = arith.mulf %4, %30 : vector<2x64x128xf32>
    %32 = vector.broadcast %29 : vector<2x1x128xf32> to vector<2x64x128xf32>
    %33 = arith.addf %31, %32 : vector<2x64x128xf32>
    %cst_14 = arith.constant 0.000000e+00 : f32
    %34 = vector.broadcast %cst_14 : f32 to vector<2x64x128xf32>
    %35 = arith.cmpf oge, %33, %34 : vector<2x64x128xf32>
    %cst_15 = arith.constant 2.000000e-01 : f32
    %36 = vector.broadcast %cst_15 : f32 to vector<2x64x128xf32>
    %37 = arith.mulf %36, %33 : vector<2x64x128xf32>
    %38 = arith.select %35, %33, %37 : vector<2x64x128xi1>, vector<2x64x128xf32>
    %c0_16 = arith.constant 0 : index
    %c0_17 = arith.constant 0 : index
    %c0_18 = arith.constant 0 : index
    %39 = vector.load %arg5[%c0_16, %c0_17, %c0_18] : memref<2x64x128xf32, #tpu.memory_space<vmem>>, vector<2x64x128xf32>
    tpu.vector_store %arg5[%c0_16, %c0_17, %c0_18], %38 {strides = array<i32>} : memref<2x64x128xf32, #tpu.memory_space<vmem>>, vector<2x64x128xf32>,
    return
  }
  func.func @transform_0(%arg0: i32) -> (i32, i32, i32) {
    %c0_i32 = arith.constant 0 : i32
    %c0_i32_0 = arith.constant 0 : i32
    %c0_i32_1 = arith.constant 0 : i32
    return %arg0, %c0_i32, %c0_i32_0 : i32, i32, i32
  }
  func.func @transform_1(%arg0: i32) -> (i32, i32) {
    %c0_i32 = arith.constant 0 : i32
    %c0_i32_0 = arith.constant 0 : i32
    %c0_i32_1 = arith.constant 0 : i32
    return %c0_i32, %c0_i32_0 : i32, i32
  }
  func.func @transform_2(%arg0: i32) -> (i32, i32) {
    %c0_i32 = arith.constant 0 : i32
    %c0_i32_0 = arith.constant 0 : i32
    %c0_i32_1 = arith.constant 0 : i32
    return %c0_i32, %c0_i32_0 : i32, i32
  }
  func.func @transform_3(%arg0: i32) -> (i32, i32) {
    %c0_i32 = arith.constant 0 : i32
    %c0_i32_0 = arith.constant 0 : i32
    %c0_i32_1 = arith.constant 0 : i32
    return %c0_i32, %c0_i32_0 : i32, i32
  }
  func.func @transform_4(%arg0: i32) -> (i32, i32, i32) {
    %c0_i32 = arith.constant 0 : i32
    %c0_i32_0 = arith.constant 0 : i32
    %c0_i32_1 = arith.constant 0 : i32
    return %arg0, %c0_i32, %c0_i32_0 : i32, i32, i32
  }
}

</mosaic_0001>

<llo_original>
// kernel: cnn_block_forward.1
$region0: #{cnn_block_forward.1}
  #allocation0 [shape = 'u32[]', space=smem, size = 0x4, offset = 0x4, fixed_abs, tag = 'smem constant byte address 0x4 - core index']
  #allocation1 [shape = 'u32[144,128]{1,0:T(1,128)}', space=vmem, size = 0x12000, scoped, tag = 'internal scratch']
  %s0 = inlined_call_operand.vmem [shape: bf16[2,64,64], index: 0, kind: input, shape index: {}]
  %s1 = inlined_call_operand.vmem [shape: bf16[64,128], index: 1, kind: input, shape index: {}]
  %s2 = inlined_call_operand.vmem [shape: f32[1,128], index: 2, kind: input, shape index: {}]
  %s3 = inlined_call_operand.vmem [shape: f32[1,128], index: 3, kind: input, shape index: {}]
  %s4 = inlined_call_operand.vmem [shape: f32[2,64,128], index: 4, kind: output, shape index: {}]
  %s5 = sld [smem:[#allocation0]]
  $region26: #{cnn_block_forward.1} parent=0
    _
  %s7 = ssub.s32 1, %s5
  %s8 = scalar_select 0, %s7, %s5
  // Predicated region
  $region2: #{cnn_block_forward.1} parent=0 // pred_check
    _
  $region3: #{cnn_block_forward.1} parent=0 // pred_check_branch
    %10 = sbr.rel (0) target = $region5
  $region4: #{cnn_block_forward.1} parent=0 // pred_region
    _
  $region5: #{cnn_block_forward.1} parent=0 // pred_fallthru
    _
  // Predicated region
  $region6: #{cnn_block_forward.1} parent=0 // pred_check
    _
  $region7: #{cnn_block_forward.1} parent=0 // pred_check_branch
    %12 = sbr.rel (0) target = $region9
  $region8: #{cnn_block_forward.1} parent=0 // pred_region
    _
  $region9: #{cnn_block_forward.1} parent=0 // pred_fallthru
    _
  // Predicated region
  $region10: #{cnn_block_forward.1} parent=0 // pred_check
    _
  $region11: #{cnn_block_forward.1} parent=0 // pred_check_branch
    %14 = sbr.rel (0) target = $region13
  $region12: #{cnn_block_forward.1} parent=0 // pred_region
    _
  $region13: #{cnn_block_forward.1} parent=0 // pred_fallthru
    _
  // Predicated region
  $region14: #{cnn_block_forward.1} parent=0 // pred_check
    _
  $region15: #{cnn_block_forward.1} parent=0 // pred_check_branch
    %16 = sbr.rel (0) target = $region17
  $region16: #{cnn_block_forward.1} parent=0 // pred_region
    _
  $region17: #{cnn_block_forward.1} parent=0 // pred_fallthru
    _
  %v18 = vld [vmem:[%s0] sm:$0xf]
  %v19 = vld [vmem:[%s0 + $0x4] sm:$0xf]
  %v20 = vld [vmem:[%s0 + $0x8] sm:$0xf]
  %v21 = vld [vmem:[%s0 + $0xc] sm:$0xf]
  %v22 = vld [vmem:[%s0 + $0x10] sm:$0xf]
  %v23 = vld [vmem:[%s0 + $0x14] sm:$0xf]
  %v24 = vld [vmem:[%s0 + $0x18] sm:$0xf]
  %v25 = vld [vmem:[%s0 + $0x1c] sm:$0xf]
  %v26 = vld [vmem:[%s0 + $0x20] sm:$0xf]
  %v27 = vld [vmem:[%s0 + $0x24] sm:$0xf]
  %v28 = vld [vmem:[%s0 + $0x28] sm:$0xf]
  %v29 = vld [vmem:[%s0 + $0x2c] sm:$0xf]
  %v30 = vld [vmem:[%s0 + $0x30] sm:$0xf]
  %v31 = vld [vmem:[%s0 + $0x34] sm:$0xf]
  %v32 = vld [vmem:[%s0 + $0x38] sm:$0xf]
  %v33 = vld [vmem:[%s0 + $0x3c] sm:$0xf]
  %v34 = vld [vmem:[%s1] sm:$0xf]
  %v35 = vld [vmem:[%s1 + $0x4] sm:$0xf]
  %v36 = vld [vmem:[%s1 + $0x8] sm:$0xf]
  %v37 = vld [vmem:[%s1 + $0xc] sm:$0xf]
  %v38 = vld [vmem:[%s1 + $0x10] sm:$0xf]
  %v39 = vld [vmem:[%s1 + $0x14] sm:$0xf]
  %v40 = vld [vmem:[%s1 + $0x18] sm:$0xf]
  %v41 = vld [vmem:[%s1 + $0x1c] sm:$0xf]
  %v58 = vunpack.c.l.b16 %v18
  %v59 = vunpack.c.l.b16 %v19
  %v60 = vunpack.c.l.b16 %v20
  %v61 = vunpack.c.l.b16 %v21
  %v62 = vunpack.c.l.b16 %v22
  %v63 = vunpack.c.l.b16 %v23
  %v64 = vunpack.c.l.b16 %v24
  %v65 = vunpack.c.l.b16 %v25
  %v66 = vunpack.c.l.b16 %v26
  %v67 = vunpack.c.l.b16 %v27
  %v68 = vunpack.c.l.b16 %v28
  %v69 = vunpack.c.l.b16 %v29
  %v70 = vunpack.c.l.b16 %v30
  %v71 = vunpack.c.l.b16 %v31
  %v72 = vunpack.c.l.b16 %v32
  %v73 = vunpack.c.l.b16 %v33
  %v74 = vpack.c.b16 %v59, %v58
  %v75 = vpack.c.b16 %v61, %v60
  %v76 = vpack.c.b16 %v63, %v62
  %v77 = vpack.c.b16 %v65, %v64
  %v78 = vpack.c.b16 %v67, %v66
  %v79 = vpack.c.b16 %v69, %v68
  %v80 = vpack.c.b16 %v71, %v70
  %v81 = vpack.c.b16 %v73, %v72
  %v90 = vunpack.c.l.b16 %v34
  %v91 = vunpack.c.l.b16 %v35
  %v92 = vunpack.c.l.b16 %v36
  %v93 = vunpack.c.l.b16 %v37
  %v94 = vunpack.c.l.b16 %v38
  %v95 = vunpack.c.l.b16 %v39
  %v96 = vunpack.c.l.b16 %v40
  %v97 = vunpack.c.l.b16 %v41
  %v98 = vpack.c.b16 %v91, %v90
  %v99 = vpack.c.b16 %v93, %v92
  %v100 = vpack.c.b16 %v95, %v94
  %v101 = vpack.c.b16 %v97, %v96
  %vm106 = vcmask 523264
  %v108 = vsel %vm106, %v74, 0
  %v111 = vsel %vm106, %v75, 0
  %v114 = vsel %vm106, %v76, 0
  %v117 = vsel %vm106, %v77, 0
  %v120 = vsel %vm106, %v78, 0
  %v123 = vsel %vm106, %v79, 0
  %v126 = vsel %vm106, %v80, 0
  %v129 = vsel %vm106, %v81, 0
  %131 = vmatprep.subr.bf16.mxu0 0
  %132 = vmatpush1.bf16.msra.mxu0 %v98
  %133 = vmatprep.subr.bf16.mxu0 0
  %134 = vmatpush1.bf16.msra.mxu0 %v99
  %135 = vmatprep.subr.bf16.mxu0 0
  %136 = vmatpush1.bf16.msra.mxu0 %v100
  %137 = vmatprep.subr.bf16.mxu0 0
  %138 = vmatpush1.bf16.msra.mxu0 %v101
  %139 = vmatprep.subr.bf16.mxu0 0
  %140 = vmatpush1.bf16.msra.mxu0 0
  %141 = vmatprep.subr.bf16.mxu0 0
  %142 = vmatpush1.bf16.msra.mxu0 0
  %143 = vmatprep.subr.bf16.mxu0 0
  %144 = vmatpush1.bf16.msra.mxu0 0
  %145 = vmatprep.subr.bf16.mxu0 0
  %146 = vmatpush1.bf16.msra.mxu0 0
  %147 = vmatprep.subr.bf16.mxu0 0
  %148 = vmatpush1.bf16.msra.mxu0 0
  %149 = vmatprep.subr.bf16.mxu0 0
  %150 = vmatpush1.bf16.msra.mxu0 0
  %151 = vmatprep.subr.bf16.mxu0 0
  %152 = vmatpush1.bf16.msra.mxu0 0
  %153 = vmatprep.subr.bf16.mxu0 0
  %154 = vmatpush1.bf16.msra.mxu0 0
  %155 = vmatprep.subr.bf16.mxu0 0
  %156 = vmatpush1.bf16.msra.mxu0 0
  %157 = vmatprep.subr.bf16.mxu0 0
  %158 = vmatpush1.bf16.msra.mxu0 0
  %159 = vmatprep.subr.bf16.mxu0 0
  %160 = vmatpush1.bf16.msra.mxu0 0
  %161 = vmatprep.subr.bf16.mxu0 0
  %162 = vmatpush1.bf16.msra.mxu0 0
  %163 = vmatprep.mubr.bf16.mxu0 0
  %164 = vmatmul.mubr.bf16.gmra.mrb[0].mxu0 %v108
  %v165 = vpop.f32.mrb[0].mxu0
  %v166 = vadd.f32 0.0, %v165
  %v167 = vpop.f32.mrb[0].mxu0
  %v168 = vpop.f32.mrb[0].mxu0
  %v169 = vadd.f32 0.0, %v168
  %v170 = vpop.f32.mrb[0].mxu0
  %171 = vmatprep.mubr.bf16.mxu0 0
  %172 = vmatmul.mubr.bf16.gmra.mrb[0].mxu0 %v111
  %v173 = vpop.f32.mrb[0].mxu0
  %v174 = vadd.f32 0.0, %v173
  %v175 = vpop.f32.mrb[0].mxu0
  %v176 = vpop.f32.mrb[0].mxu0
  %v177 = vadd.f32 0.0, %v176
  %v178 = vpop.f32.mrb[0].mxu0
  %179 = vmatprep.mubr.bf16.mxu0 0
  %180 = vmatmul.mubr.bf16.gmra.mrb[0].mxu0 %v114
  %v181 = vpop.f32.mrb[0].mxu0
  %v182 = vadd.f32 0.0, %v181
  %v183 = vpop.f32.mrb[0].mxu0
  %v184 = vpop.f32.mrb[0].mxu0
  %v185 = vadd.f32 0.0, %v184
  %v186 = vpop.f32.mrb[0].mxu0
  %187 = vmatprep.mubr.bf16.mxu0 0
  %188 = vmatmul.mubr.bf16.gmra.mrb[0].mxu0 %v117
  %v189 = vpop.f32.mrb[0].mxu0
  %v190 = vadd.f32 0.0, %v189
  %v191 = vpop.f32.mrb[0].mxu0
  %v192 = vpop.f32.mrb[0].mxu0
  %v193 = vadd.f32 0.0, %v192
  %v194 = vpop.f32.mrb[0].mxu0
  %195 = vmatprep.mubr.bf16.mxu0 0
  %196 = vmatmul.mubr.bf16.gmra.mrb[0].mxu0 %v120
  %v197 = vpop.f32.mrb[0].mxu0
  %v198 = vadd.f32 0.0, %v197
  %v199 = vpop.f32.mrb[0].mxu0
  %v200 = vpop.f32.mrb[0].mxu0
  %v201 = vadd.f32 0.0, %v200
  %v202 = vpop.f32.mrb[0].mxu0
  %203 = vmatprep.mubr.bf16.mxu0 0
  %204 = vmatmul.mubr.bf16.gmra.mrb[0].mxu0 %v123
  %v205 = vpop.f32.mrb[0].mxu0
  %v206 = vadd.f32 0.0, %v205
  %v207 = vpop.f32.mrb[0].mxu0
  %v208 = vpop.f32.mrb[0].mxu0
  %v209 = vadd.f32 0.0, %v208
  %v210 = vpop.f32.mrb[0].mxu0
  %211 = vmatprep.mubr.bf16.mxu0 0
  %212 = vmatmul.mubr.bf16.gmra.mrb[0].mxu0 %v126
  %v213 = vpop.f32.mrb[0].mxu0
  %v214 = vadd.f32 0.0, %v213
  %v215 = vpop.f32.mrb[0].mxu0
  %v216 = vpop.f32.mrb[0].mxu0
  %v217 = vadd.f32 0.0, %v216
  %v218 = vpop.f32.mrb[0].mxu0
  %219 = vmatprep.mubr.bf16.mxu0 0
  %220 = vmatmul.mubr.bf16.gmra.mrb[0].mxu0 %v129
  %v221 = vpop.f32.mrb[0].mxu0
  %v222 = vadd.f32 0.0, %v221
  %v223 = vpop.f32.mrb[0].mxu0
  %v224 = vpop.f32.mrb[0].mxu0
  %v225 = vadd.f32 0.0, %v224
  %v226 = vpop.f32.mrb[0].mxu0
  %227 = vdwg.mxu0
  %v228 = vadd.f32 %v166, %v169
  %v229 = vadd.f32 %v228, %v174
  %v230 = vadd.f32 %v229, %v177
  %v231 = vadd.f32 %v230, %v182
  %v232 = vadd.f32 %v231, %v185
  %v233 = vadd.f32 %v232, %v190
  %v234 = vadd.f32 %v233, %v193
  %v235 = vrot.slane %v234, 4
  %v236 = vadd.f32 %v234, %v235
  %v237 = vrot.slane %v236, 2
  %v238 = vadd.f32 %v236, %v237
  %v239 = vrot.slane %v238, 1
  %v240 = vadd.f32 %v238, %v239
  %v241 = vadd.f32 %v198, %v201
  %v242 = vadd.f32 %v241, %v206
  %v243 = vadd.f32 %v242, %v209
  %v244 = vadd.f32 %v243, %v214
  %v245 = vadd.f32 %v244, %v217
  %v246 = vadd.f32 %v245, %v222
  %v247 = vadd.f32 %v246, %v225
  %v248 = vrot.slane %v247, 4
  %v249 = vadd.f32 %v247, %v248
  %v250 = vrot.slane %v249, 2
  %v251 = vadd.f32 %v249, %v250
  %v252 = vrot.slane %v251, 1
  %v253 = vadd.f32 %v251, %v252
  %v254 = vmul.f32 %v166, %v166
  %v255 = vmul.f32 %v169, %v169
  %v256 = vmul.f32 %v174, %v174
  %v257 = vmul.f32 %v177, %v177
  %v258 = vmul.f32 %v182, %v182
  %v259 = vmul.f32 %v185, %v185
  %v260 = vmul.f32 %v190, %v190
  %v261 = vmul.f32 %v193, %v193
  %v262 = vmul.f32 %v198, %v198
  %v263 = vmul.f32 %v201, %v201
  %v264 = vmul.f32 %v206, %v206
  %v265 = vmul.f32 %v209, %v209
  %v266 = vmul.f32 %v214, %v214
  %v267 = vmul.f32 %v217, %v217
  %v268 = vmul.f32 %v222, %v222
  %v269 = vmul.f32 %v225, %v225
  %v270 = vadd.f32 %v254, %v255
  %v271 = vadd.f32 %v270, %v256
  %v272 = vadd.f32 %v271, %v257
  %v273 = vadd.f32 %v272, %v258
  %v274 = vadd.f32 %v273, %v259
  %v275 = vadd.f32 %v274, %v260
  %v276 = vadd.f32 %v275, %v261
  %v277 = vrot.slane %v276, 4
  %v278 = vadd.f32 %v276, %v277
  %v279 = vrot.slane %v278, 2
  %v280 = vadd.f32 %v278, %v279
  %v281 = vrot.slane %v280, 1
  %v282 = vadd.f32 %v280, %v281
  %v283 = vadd.f32 %v262, %v263
  %v284 = vadd.f32 %v283, %v264
  %v285 = vadd.f32 %v284, %v265
  %v286 = vadd.f32 %v285, %v266
  %v287 = vadd.f32 %v286, %v267
  %v288 = vadd.f32 %v287, %v268
  %v289 = vadd.f32 %v288, %v269
  %v290 = vrot.slane %v289, 4
  %v291 = vadd.f32 %v289, %v290
  %v292 = vrot.slane %v291, 2
  %v293 = vadd.f32 %v291, %v292
  %v294 = vrot.slane %v293, 1
  %v295 = vadd.f32 %v293, %v294
  %v296 = vmul.f32 %v240, 0.015625
  %v297 = vmul.f32 %v253, 0.015625
  %v298 = vmul.f32 %v282, 0.015625
  %v299 = vmul.f32 %v295, 0.015625
  %v300 = vmul.f32 %v296, %v296
  %v301 = vmul.f32 %v297, %v297
  %v302 = vsub.f32 %v298, %v300
  %v303 = vsub.f32 %v299, %v301
  %v304 = vmax.f32 %v302, 0.0
  %v305 = vmax.f32 %v303, 0.0
  %v306 = vadd.f32 %v304, 1e-05
  %v307 = vadd.f32 %v305, 1e-05
  %v308 = vrsqrt.pop %v306
  %v309 = vrsqrt.pop %v307
  %v310 = vld [vmem:[%s2] sm:$0x1]
  %v311 = vmul.f32 %v310, %v308
  %v312 = vmul.f32 %v310, %v309
  %v313 = vld [vmem:[%s3] sm:$0x1]
  %v314 = vmul.f32 %v296, %v311
  %v315 = vmul.f32 %v297, %v312
  %v316 = vsub.f32 %v313, %v314
  %v317 = vsub.f32 %v313, %v315
  %v320 = vlaneseq
  %v321 = vshrl.u32 %v320, 7
  %v322 = vsub.s32 0, %v321
  %v323 = vrot.slane %v311, %v322
  %v324 = vlaneseq
  %v325 = vshrl.u32 %v324, 7
  %v326 = vsub.s32 0, %v325
  %v327 = vrot.slane %v312, %v326
  %v330 = vmul.f32 %v166, %v323
  %v331 = vmul.f32 %v169, %v323
  %v332 = vmul.f32 %v174, %v323
  %v333 = vmul.f32 %v177, %v323
  %v334 = vmul.f32 %v182, %v323
  %v335 = vmul.f32 %v185, %v323
  %v336 = vmul.f32 %v190, %v323
  %v337 = vmul.f32 %v193, %v323
  %v338 = vmul.f32 %v198, %v327
  %v339 = vmul.f32 %v201, %v327
  %v340 = vmul.f32 %v206, %v327
  %v341 = vmul.f32 %v209, %v327
  %v342 = vmul.f32 %v214, %v327
  %v343 = vmul.f32 %v217, %v327
  %v344 = vmul.f32 %v222, %v327
  %v345 = vmul.f32 %v225, %v327
  %v348 = vlaneseq
  %v349 = vshrl.u32 %v348, 7
  %v350 = vsub.s32 0, %v349
  %v351 = vrot.slane %v316, %v350
  %v352 = vlaneseq
  %v353 = vshrl.u32 %v352, 7
  %v354 = vsub.s32 0, %v353
  %v355 = vrot.slane %v317, %v354
  %v358 = vadd.f32 %v330, %v351
  %v359 = vadd.f32 %v331, %v351
  %v360 = vadd.f32 %v332, %v351
  %v361 = vadd.f32 %v333, %v351
  %v362 = vadd.f32 %v334, %v351
  %v363 = vadd.f32 %v335, %v351
  %v364 = vadd.f32 %v336, %v351
  %v365 = vadd.f32 %v337, %v351
  %v366 = vadd.f32 %v338, %v355
  %v367 = vadd.f32 %v339, %v355
  %v368 = vadd.f32 %v340, %v355
  %v369 = vadd.f32 %v341, %v355
  %v370 = vadd.f32 %v342, %v355
  %v371 = vadd.f32 %v343, %v355
  %v372 = vadd.f32 %v344, %v355
  %v373 = vadd.f32 %v345, %v355
  %vm374 = vcmp.ge.f32.partialorder %v358, 0.0
  %vm375 = vcmp.ge.f32.partialorder %v359, 0.0
  %vm376 = vcmp.ge.f32.partialorder %v360, 0.0
  %vm377 = vcmp.ge.f32.partialorder %v361, 0.0
  %vm378 = vcmp.ge.f32.partialorder %v362, 0.0
  %vm379 = vcmp.ge.f32.partialorder %v363, 0.0
  %vm380 = vcmp.ge.f32.partialorder %v364, 0.0
  %vm381 = vcmp.ge.f32.partialorder %v365, 0.0
  %vm382 = vcmp.ge.f32.partialorder %v366, 0.0
  %vm383 = vcmp.ge.f32.partialorder %v367, 0.0
  %vm384 = vcmp.ge.f32.partialorder %v368, 0.0
  %vm385 = vcmp.ge.f32.partialorder %v369, 0.0
  %vm386 = vcmp.ge.f32.partialorder %v370, 0.0
  %vm387 = vcmp.ge.f32.partialorder %v371, 0.0
  %vm388 = vcmp.ge.f32.partialorder %v372, 0.0
  %vm389 = vcmp.ge.f32.partialorder %v373, 0.0
  %v390 = vmul.f32 %v358, 0.2
  %v391 = vmul.f32 %v359, 0.2
  %v392 = vmul.f32 %v360, 0.2
  %v393 = vmul.f32 %v361, 0.2
  %v394 = vmul.f32 %v362, 0.2
  %v395 = vmul.f32 %v363, 0.2
  %v396 = vmul.f32 %v364, 0.2
  %v397 = vmul.f32 %v365, 0.2
  %v398 = vmul.f32 %v366, 0.2
  %v399 = vmul.f32 %v367, 0.2
  %v400 = vmul.f32 %v368, 0.2
  %v401 = vmul.f32 %v369, 0.2
  %v402 = vmul.f32 %v370, 0.2
  %v403 = vmul.f32 %v371, 0.2
  %v404 = vmul.f32 %v372, 0.2
  %v405 = vmul.f32 %v373, 0.2
  %v406 = vsel %vm374, %v358, %v390
  %v407 = vsel %vm375, %v359, %v391
  %v408 = vsel %vm376, %v360, %v392
  %v409 = vsel %vm377, %v361, %v393
  %v410 = vsel %vm378, %v362, %v394
  %v411 = vsel %vm379, %v363, %v395
  %v412 = vsel %vm380, %v364, %v396
  %v413 = vsel %vm381, %v365, %v397
  %v414 = vsel %vm382, %v366, %v398
  %v415 = vsel %vm383, %v367, %v399
  %v416 = vsel %vm384, %v368, %v400
  %v417 = vsel %vm385, %v369, %v401
  %v418 = vsel %vm386, %v370, %v402
  %v419 = vsel %vm387, %v371, %v403
  %v420 = vsel %vm388, %v372, %v404
  %v421 = vsel %vm389, %v373, %v405
  %422 = vst [vmem:[%s4] sm:$0xff] %v406
  %423 = vst [vmem:[%s4 + $0x8] sm:$0xff] %v407
  %424 = vst [vmem:[%s4 + $0x10] sm:$0xff] %v408
  %425 = vst [vmem:[%s4 + $0x18] sm:$0xff] %v409
  %426 = vst [vmem:[%s4 + $0x20] sm:$0xff] %v410
  %427 = vst [vmem:[%s4 + $0x28] sm:$0xff] %v411
  %428 = vst [vmem:[%s4 + $0x30] sm:$0xff] %v412
  %429 = vst [vmem:[%s4 + $0x38] sm:$0xff] %v413
  %430 = vst [vmem:[%s4 + $0x40] sm:$0xff] %v414
  %431 = vst [vmem:[%s4 + $0x48] sm:$0xff] %v415
  %432 = vst [vmem:[%s4 + $0x50] sm:$0xff] %v416
  %433 = vst [vmem:[%s4 + $0x58] sm:$0xff] %v417
  %434 = vst [vmem:[%s4 + $0x60] sm:$0xff] %v418
  %435 = vst [vmem:[%s4 + $0x68] sm:$0xff] %v419
  %436 = vst [vmem:[%s4 + $0x70] sm:$0xff] %v420
  %437 = vst [vmem:[%s4 + $0x78] sm:$0xff] %v421
  // Predicated region
  $region18: #{cnn_block_forward.1} parent=0 // pred_check
    _
  $region19: #{cnn_block_forward.1} parent=0 // pred_check_branch
    %439 = sbr.rel (0) target = $region21
  $region20: #{cnn_block_forward.1} parent=0 // pred_region
    _
  $region21: #{cnn_block_forward.1} parent=0 // pred_fallthru
    _
  // Predicated region
  $region22: #{cnn_block_forward.1} parent=0 // pred_check
    _
  $region23: #{cnn_block_forward.1} parent=0 // pred_check_branch
    %441 = sbr.rel (0) target = $region25
  $region24: #{cnn_block_forward.1} parent=0 // pred_region
    _
  $region25: #{cnn_block_forward.1} parent=0 // pred_fallthru
    _

</llo_original>
